<compile_context>
chip_gen: v5e
topology: v5e:2x2
jax: 0.10.0
libtpu: 0.0.40
codegen_flags: <defaults>
</compile_context>

<pallas_src>
import functools

import jax
import jax.numpy as jnp
from jax.experimental import pallas as pl
from jax.experimental.pallas import tpu as pltpu


def _type_matching_kernel(x_ref, wf_ref, bf_ref, scale_ref, out_ref, *, threshold):
    # x_ref:     (tn, E)   embeddings tile
    # wf_ref:    (E, Fp)   fused weight (s @ w).T, zero-padded on F
    # bf_ref:    (1, Fp)   fused bias b @ s.T, padded columns = -1e30
    # scale_ref: (1,)      SMEM scalar: -1/sigma
    # out_ref:   (tn, Fp)  compatibility, (N, F) orientation (lane-dense F)
    x = x_ref[...]

    # Single fused GEMM:  t @ s.T  ==  x @ Wf + bf
    score = jnp.dot(x, wf_ref[...], preferred_element_type=jnp.float32)
    dist = 1.0 - (score + bf_ref[...])                    # (tn, Fp)

    # mask + negative exponentiation.  Padded F columns have bf = -1e30, so
    # dist ~ +1e30 and exp(dist * -1/sigma) underflows to exactly 0 -> they
    # do not contribute to the normalization sum.
    neg_inv_sigma = scale_ref[0]
    mask = (dist > threshold).astype(jnp.float32)
    hat = jnp.exp(dist * neg_inv_sigma) * mask            # (tn, Fp)

    # normalize over the function axis F (PyTorch: sum over dim=1 of (B,F,N))
    norm = jnp.sum(hat, axis=-1, keepdims=True) + 1e-5    # (tn, 1)
    out_ref[...] = (hat * pl.reciprocal(norm)).astype(out_ref.dtype)


def _pick_row_tile(n_rows, e, fp, vmem_budget_bytes=24 << 20):
    """Row-tile size: double-buffered (x tile + out tile) fits a conservative
    VMEM budget (safe on v7x's 64 MiB physical / 32 MiB default scoped VMEM)."""
    tn = 512
    while tn > 8 and 2 * tn * (e + fp) * 4 > vmem_budget_bytes:
        tn //= 2
    n_rounded = max(8, ((n_rows + 7) // 8) * 8)
    return min(tn, n_rounded)


def type_matching(x, w, b, s, sigma, *, threshold, tn=None, vmem_limit_bytes=None):
    """x: (B, N, E), w: (S, E), b: (1, S), s: (F, S), sigma: (1, 1) -> (B, F, N)."""
    B, N, E = x.shape
    F = s.shape[0]

    # --- host-side (XLA) preprocessing: fuse the linear type-inference ------
    #   t @ s.T = (x @ w.T + b) @ s.T = x @ (s @ w).T + b @ s.T
    wf = jnp.transpose(s @ w).astype(jnp.float32)         # (E, F), pre-transposed
    bf = (b @ s.T).astype(jnp.float32)                    # (1, F)
    neg_inv_sigma = (-1.0 / sigma).reshape((1,)).astype(jnp.float32)  # SMEM scalar

    # Lane-dense padding of the function axis, sublane-friendly N tiling.
    Fp = pl.cdiv(F, 128) * 128
    if tn is None:
        tn = _pick_row_tile(N, E, Fp)
    Np = pl.cdiv(N, tn) * tn

    wf_p = jnp.pad(wf, ((0, 0), (0, Fp - F)))                              # zeros
    bf_p = jnp.pad(bf, ((0, 0), (0, Fp - F)), constant_values=-1e30)       # kill pad cols
    x_p = jnp.pad(x, ((0, 0), (0, Np - N), (0, 0)))

    kernel = functools.partial(_type_matching_kernel, threshold=threshold)

    out_padded = pl.pallas_call(
        kernel,
        out_shape=jax.ShapeDtypeStruct((B, Np, Fp), jnp.float32),
        grid_spec=pltpu.PrefetchScalarGridSpec(
            num_scalar_prefetch=0,
            grid=(B, Np // tn),
            in_specs=[
                # x tile: leading batch dim squeezed away -> kernel sees (tn, E)
                pl.BlockSpec((None, tn, E), lambda bi, ni: (bi, ni, 0)),
                # fused weight / bias: constant index_map -> resident across grid
                pl.BlockSpec((E, Fp), lambda bi, ni: (0, 0)),
                pl.BlockSpec((1, Fp), lambda bi, ni: (0, 0)),
                # -1/sigma scalar lives in SMEM (no vector load / lane extract)
                pl.BlockSpec(memory_space=pltpu.MemorySpace.SMEM),
            ],
            out_specs=pl.BlockSpec((None, tn, Fp), lambda bi, ni: (bi, ni, 0)),
        ),
        compiler_params=pltpu.CompilerParams(
            dimension_semantics=("parallel", "parallel"),
            vmem_limit_bytes=vmem_limit_bytes,
        ),
    )(x_p, wf_p, bf_p, neg_inv_sigma)

    # Strip padding and present the module's (B, F, N) layout with a single
    # XLA-side transpose (cheaper than a per-tile XLU transpose in-kernel).
    return jnp.transpose(out_padded[:, :N, :F], (0, 2, 1))


def _reference(x, w, b, s, sigma, threshold):
    # Direct translation of the PyTorch forward (un-fused), for verification.
    t = jnp.einsum("bne,se->bns", x, w) + b[0]            # (B, N, S)
    dist = 1.0 - jnp.einsum("bns,fs->bnf", t, s)          # (B, N, F)
    mask = (dist > threshold).astype(jnp.float32)
    hat = jnp.exp(-dist / sigma[0, 0]) * mask             # (B, N, F)
    hat = jnp.transpose(hat, (0, 2, 1))                   # (B, F, N)
    norm = hat.sum(axis=1, keepdims=True) + 1e-5
    return hat / norm


if __name__ == "__main__":
    # Small shapes consistent with the forward: B x N x E embeddings,
    # F function signatures of size S.
    B, N, E, S, F = 2, 8, 32, 16, 4
    threshold = 0.1

    key = jax.random.PRNGKey(0)
    kx, kw, kb, ks = jax.random.split(key, 4)

    x = jax.random.normal(kx, (B, N, E), dtype=jnp.float32)
    # Deterministic parameter init (synthetic; no checkpoint load).
    w = jax.random.normal(kw, (S, E), dtype=jnp.float32) * 0.1   # type_inference weight
    b = jax.random.normal(kb, (1, S), dtype=jnp.float32) * 0.1   # type_inference bias
    s = jax.random.normal(ks, (F, S), dtype=jnp.float32) * 0.5   # funcSign
    sigma = jnp.ones((1, 1), dtype=jnp.float32)                  # nn.Parameter(torch.ones(1))

    out = type_matching(x, w, b, s, sigma, threshold=threshold)
    out = jax.block_until_ready(out)

    ref = _reference(x, w, b, s, sigma, threshold)
    assert out.shape == (B, F, N)
    # Weight fusion changes associativity -> allow a few-ulp f32 drift.
    assert jnp.allclose(out, ref, atol=1e-4, rtol=1e-4), "mismatch vs reference"

    print("KERNEL_OK")
</pallas_src>

<mosaic_0001>
module attributes {stable_mosaic.version = 11 : i64} {
  func.func @_type_matching_kernel(%arg0: i32, %arg1: i32, %arg2: memref<1x8x32xf32, #tpu.memory_space<vmem>>, %arg3: memref<32x128xf32, #tpu.memory_space<vmem>>, %arg4: memref<1x128xf32, #tpu.memory_space<vmem>>, %arg5: memref<1xf32, #tpu.memory_space<smem>>, %arg6: memref<1x8x128xf32, #tpu.memory_space<vmem>>) attributes {dimension_semantics = [#tpu.dimension_semantics<parallel>, #tpu.dimension_semantics<parallel>], iteration_bounds = array<i64: 2, 1>, scalar_prefetch = 0 : i64, scratch_operands = 0 : i64, tpu.core_type = #tpu.core_type<tc>, window_params = [{transform_indices = @transform_0, window_bounds = array<i64: 1, 8, 32>}, {pipeline_mode = #tpu.pipeline_mode<synchronous>, transform_indices = @transform_1, window_bounds = array<i64: 32, 128>}, {pipeline_mode = #tpu.pipeline_mode<synchronous>, transform_indices = @transform_2, window_bounds = array<i64: 1, 128>}, {transform_indices = @transform_3, window_bounds = array<i64: 1>}, {transform_indices = @transform_4, window_bounds = array<i64: 1, 8, 128>}]} {
    %c0 = arith.constant 0 : index
    %c0_0 = arith.constant 0 : index
    %c0_1 = arith.constant 0 : index
    %0 = vector.load %arg2[%c0, %c0_0, %c0_1] : memref<1x8x32xf32, #tpu.memory_space<vmem>>, vector<1x8x32xf32>
    %1 = vector.shape_cast %0 : vector<1x8x32xf32> to vector<8x32xf32>
    %c0_2 = arith.constant 0 : index
    %c0_3 = arith.constant 0 : index
    %2 = vector.load %arg3[%c0_2, %c0_3] : memref<32x128xf32, #tpu.memory_space<vmem>>, vector<32x128xf32>
    %cst = arith.constant dense<0.000000e+00> : vector<8x128xf32>
    %3 = tpu.matmul %1, %2, %cst {dimension_numbers = #tpu.dot_dimension_numbers<[1], [0], [0], [1], [0, 0, 1, 1], [], []>} : vector<8x32xf32>, vector<32x128xf32>, vector<8x128xf32> -> vector<8x128xf32>
    %c0_4 = arith.constant 0 : index
    %c0_5 = arith.constant 0 : index
    %4 = vector.load %arg4[%c0_4, %c0_5] : memref<1x128xf32, #tpu.memory_space<vmem>>, vector<1x128xf32>
    %5 = vector.broadcast %4 : vector<1x128xf32> to vector<8x128xf32>
    %6 = arith.addf %3, %5 : vector<8x128xf32>
    %cst_6 = arith.constant 1.000000e+00 : f32
    %7 = vector.broadcast %cst_6 : f32 to vector<8x128xf32>
    %8 = arith.subf %7, %6 : vector<8x128xf32>
    %c0_7 = arith.constant 0 : index
    %9 = memref.load %arg5[%c0_7] : memref<1xf32, #tpu.memory_space<smem>>
    %cst_8 = arith.constant 1.000000e-01 : f32
    %10 = vector.broadcast %cst_8 : f32 to vector<8x128xf32>
    %11 = arith.cmpf ogt, %8, %10 : vector<8x128xf32>
    %12 = arith.extui %11 : vector<8x128xi1> to vector<8x128xi32>
    %13 = arith.sitofp %12 : vector<8x128xi32> to vector<8x128xf32>
    %14 = vector.broadcast %9 : f32 to vector<8x128xf32>
    %15 = arith.mulf %8, %14 : vector<8x128xf32>
    %16 = math.exp %15 : vector<8x128xf32>
    %17 = arith.mulf %16, %13 : vector<8x128xf32>
    %cst_9 = arith.constant dense<0.000000e+00> : vector<8xf32>
    %18 = vector.multi_reduction <add>, %17, %cst_9 [1] : vector<8x128xf32> to vector<8xf32>
    %19 = vector.shape_cast %18 : vector<8xf32> to vector<8x1xf32>
    %cst_10 = arith.constant 9.99999974E-6 : f32
    %20 = vector.broadcast %cst_10 : f32 to vector<8x1xf32>
    %21 = arith.addf %19, %20 : vector<8x1xf32>
    %22 = tpu.reciprocal %21 : vector<8x1xf32> -> vector<8x1xf32>
    %23 = vector.broadcast %22 : vector<8x1xf32> to vector<8x128xf32>
    %24 = arith.mulf %17, %23 : vector<8x128xf32>
    %c0_11 = arith.constant 0 : index
    %c0_12 = arith.constant 0 : index
    %c0_13 = arith.constant 0 : index
    %25 = vector.load %arg6[%c0_11, %c0_12, %c0_13] : memref<1x8x128xf32, #tpu.memory_space<vmem>>, vector<1x8x128xf32>
    %26 = vector.shape_cast %25 : vector<1x8x128xf32> to vector<8x128xf32>
    %27 = vector.shape_cast %24 : vector<8x128xf32> to vector<1x8x128xf32>
    tpu.vector_store %arg6[%c0_11, %c0_12, %c0_13], %27 {strides = array<i32>} : memref<1x8x128xf32, #tpu.memory_space<vmem>>, vector<1x8x128xf32>,
    return
  }
  func.func @transform_0(%arg0: i32, %arg1: i32) -> (i32, i32, i32) {
    %c0_i32 = arith.constant 0 : i32
    %c0_i32_0 = arith.constant 0 : i32
    return %arg0, %arg1, %c0_i32 : i32, i32, i32
  }
  func.func @transform_1(%arg0: i32, %arg1: i32) -> (i32, i32) {
    %c0_i32 = arith.constant 0 : i32
    %c0_i32_0 = arith.constant 0 : i32
    %c0_i32_1 = arith.constant 0 : i32
    return %c0_i32, %c0_i32_0 : i32, i32
  }
  func.func @transform_2(%arg0: i32, %arg1: i32) -> (i32, i32) {
    %c0_i32 = arith.constant 0 : i32
    %c0_i32_0 = arith.constant 0 : i32
    %c0_i32_1 = arith.constant 0 : i32
    return %c0_i32, %c0_i32_0 : i32, i32
  }
  func.func @transform_3(%arg0: i32, %arg1: i32) -> i32 {
    %c0_i32 = arith.constant 0 : i32
    %c0_i32_0 = arith.constant 0 : i32
    return %c0_i32 : i32
  }
  func.func @transform_4(%arg0: i32, %arg1: i32) -> (i32, i32, i32) {
    %c0_i32 = arith.constant 0 : i32
    %c0_i32_0 = arith.constant 0 : i32
    return %arg0, %arg1, %c0_i32 : i32, i32, i32
  }
}

</mosaic_0001>

<llo_original>
// kernel: tpu_custom_call.1
$region0: #{tpu_custom_call.1}
  #allocation0 [shape = 'u32[]', space=smem, size = 0x4, offset = 0x4, fixed_abs, tag = 'smem constant byte address 0x4 - core index']
  #allocation1 [shape = 'u32[72,128]{1,0:T(1,128)}', space=vmem, size = 0x9000, scoped, tag = 'internal scratch']
  #allocation2 [shape = 'f32[1]{0:T(128)S(6)}', space=smem, size = 0x200, scoped, tag = 'scoped memory for tpu_custom_call.1']
  %s0 = inlined_call_operand.hbm [shape: f32[2,8,32], index: 0, kind: input, shape index: {}]
  %s1 = inlined_call_operand.hbm [shape: f32[32,128], index: 1, kind: input, shape index: {}]
  %s2 = inlined_call_operand.vmem [shape: f32[1,128], index: 2, kind: input, shape index: {}]
  %s3 = inlined_call_operand.<no memory space> [shape: f32[1], index: 3, kind: input, shape index: {}]
  %s4 = inlined_call_operand.hbm [shape: f32[2,8,128], index: 4, kind: output, shape index: {}]
  %s5 = sld [smem:[#allocation0]]
  $region57: #{tpu_custom_call.1} parent=0
    _
  %s7 = ssub.s32 1, %s5
  %s8 = scalar_select 0, %s7, %s5
  %9 = sst [smem:[#allocation2]] %s3
  $region1: #{tpu_custom_call.1} parent=0
    #allocation3 [shape = 'u8[8192]{0}', space=vmem, size = 0x2000, scoped, tag = 'input window, operand 0']
    #allocation4 [shape = 's32[2]{0}', space=sflag, size = 0x8, scoped, tag = 'scoped memory for tpu_custom_call.1']
    #allocation5 [shape = 's32[2]{0}', space=sflag, size = 0x8, scoped, tag = 'scoped memory for tpu_custom_call.1']
    #allocation6 [shape = 'u8[16384]{0}', space=vmem, size = 0x4000, scoped, tag = 'input window, operand 1, single buffered']
    #allocation7 [shape = 's32[1]{0}', space=sflag, size = 0x4, scoped, tag = 'scoped memory for tpu_custom_call.1']
    #allocation8 [shape = 'u8[8192]{0}', space=vmem, size = 0x2000, scoped, tag = 'output window, operand 0']
    %10 = vsyncpa [#allocation4], 0
    %s11 = scalar_lea.sflag [#allocation4], 1
    %12 = vsyncpa %s11, 0
    %13 = vsyncpa [#allocation7], 0
    %14 = vsyncpa [#allocation5], 0
    %s15 = scalar_lea.sflag [#allocation5], 1
    %16 = vsyncpa %s15, 0
    loop: start=0, step=1, limit=4
    $region2: #{tpu_custom_call.1} parent=1 // loop_pre_header
      _
    $region3: #{tpu_custom_call.1} parent=1 // loop_header
      %s18 = sphi 0, %s22
      %p19 = scmp.ge.s32.totalorder %s18, 4
      %s25 = sphi 0, %s37
      %s26 = sphi 0, %s33
      %s27 = sphi 0, %s25
      %s28 = sphi 0, %s26
      %s29 = sphi 0, %s27
      %s30 = sphi 0, %s28
      %s42 = sphi 0, %s44
      %s45 = sphi 0, %s42
      %s46 = sphi 0, %s45
      %s62 = sphi 0, %s46
      %s66 = sphi 0, %s66
      %s68 = sphi 0, %s66
      %s69 = sphi 0, %s68
      %s83 = sphi 0, %s69
      %s87 = sphi 0, %s87
      %s89 = sphi 0, %s87
      %s90 = sphi 0, %s89
      %s104 = sphi 0, %s90
      %s108 = sphi 0, %s108
      %s110 = sphi 0, %s108
      %s111 = sphi 0, %s110
      %s125 = sphi 0, %s111
      %s133 = sphi 0, %s135
      %s136 = sphi 0, %s133
      %s137 = sphi 0, %s136
      %s153 = sphi 0, %s137
    $region4: #{tpu_custom_call.1} parent=1 // loop_header_branch
      %21 = sbr.rel (%p19) target = $region8
    $region5: #{tpu_custom_call.1} parent=1 // loop_body
      %s23 = ssub.s32 %s18, 1
      %s24 = ssub.s32 %s18, 2
      %s31 = sadd.s32 1, %s26
      %p32 = scmp.ge.s32.totalorder %s31, 1
      %s33 = scalar_select %p32, 0, %s31
      %s34 = sadd.s32 1, %s25
      %s35 = scalar_select %p32, %s34, %s25
      %p36 = scmp.ge.s32.totalorder %s35, 2
      %s37 = scalar_select %p36, 0, %s35
      %s38 = ssub.s32 %s25, %s37
      %s39 = ssub.s32 %s26, %s33
      %s40 = sor.u32 %s38, %s39
      %p41 = scmp.eq.s32.totalorder %s40, 0
      %s43 = sadd.s32 %s42, 1
      %s44 = scalar_select %p41, %s42, %s43
      %p47 = pneg %p41
      %p48 = scmp.eq.s32.totalorder %s18, 1
      %p49 = por %p47, %p48
      %p50 = scmp.ne.s32.totalorder %s42, %s45
      %p51 = scmp.eq.s32.totalorder %s18, 0
      %p52 = por %p50, %p51
      %p53 = scmp.ne.s32.totalorder %s42, %s45
      %p54 = scmp.eq.s32.totalorder %s23, 1
      %p55 = por %p53, %p54
      %p56 = scmp.ne.s32.totalorder %s45, %s46
      %p57 = scmp.eq.s32.totalorder %s23, 0
      %p58 = por %p56, %p57
      %p59 = scmp.ne.s32.totalorder %s45, %s46
      %p60 = scmp.eq.s32.totalorder %s24, 1
      %p61 = por %p59, %p60
      %p63 = scmp.ne.s32.totalorder %s46, %s62
      %p64 = scmp.eq.s32.totalorder %s24, 0
      %p65 = por %p63, %p64
      %s67 = sadd.s32 %s66, 1
      %p70 = scmp.eq.s32.totalorder %s18, 1
      %p71 = scmp.ne.s32.totalorder %s66, %s68
      %p72 = scmp.eq.s32.totalorder %s18, 0
      %p73 = por %p71, %p72
      %p74 = scmp.ne.s32.totalorder %s66, %s68
      %p75 = scmp.eq.s32.totalorder %s23, 1
      %p76 = por %p74, %p75
      %p77 = scmp.ne.s32.totalorder %s68, %s69
      %p78 = scmp.eq.s32.totalorder %s23, 0
      %p79 = por %p77, %p78
      %p80 = scmp.ne.s32.totalorder %s68, %s69
      %p81 = scmp.eq.s32.totalorder %s24, 1
      %p82 = por %p80, %p81
      %p84 = scmp.ne.s32.totalorder %s69, %s83
      %p85 = scmp.eq.s32.totalorder %s24, 0
      %p86 = por %p84, %p85
      %s88 = sadd.s32 %s87, 1
      %p91 = scmp.eq.s32.totalorder %s18, 1
      %p92 = scmp.ne.s32.totalorder %s87, %s89
      %p93 = scmp.eq.s32.totalorder %s18, 0
      %p94 = por %p92, %p93
      %p95 = scmp.ne.s32.totalorder %s87, %s89
      %p96 = scmp.eq.s32.totalorder %s23, 1
      %p97 = por %p95, %p96
      %p98 = scmp.ne.s32.totalorder %s89, %s90
      %p99 = scmp.eq.s32.totalorder %s23, 0
      %p100 = por %p98, %p99
      %p101 = scmp.ne.s32.totalorder %s89, %s90
      %p102 = scmp.eq.s32.totalorder %s24, 1
      %p103 = por %p101, %p102
      %p105 = scmp.ne.s32.totalorder %s90, %s104
      %p106 = scmp.eq.s32.totalorder %s24, 0
      %p107 = por %p105, %p106
      %s109 = sadd.s32 %s108, 1
      %p112 = scmp.eq.s32.totalorder %s18, 1
      %p113 = scmp.ne.s32.totalorder %s108, %s110
      %p114 = scmp.eq.s32.totalorder %s18, 0
      %p115 = por %p113, %p114
      %p116 = scmp.ne.s32.totalorder %s108, %s110
      %p117 = scmp.eq.s32.totalorder %s23, 1
      %p118 = por %p116, %p117
      %p119 = scmp.ne.s32.totalorder %s110, %s111
      %p120 = scmp.eq.s32.totalorder %s23, 0
      %p121 = por %p119, %p120
      %p122 = scmp.ne.s32.totalorder %s110, %s111
      %p123 = scmp.eq.s32.totalorder %s24, 1
      %p124 = por %p122, %p123
      %p126 = scmp.ne.s32.totalorder %s111, %s125
      %p127 = scmp.eq.s32.totalorder %s24, 0
      %p128 = por %p126, %p127
      %s129 = ssub.s32 %s25, %s37
      %s130 = ssub.s32 %s26, %s33
      %s131 = sor.u32 %s129, %s130
      %p132 = scmp.eq.s32.totalorder %s131, 0
      %s134 = sadd.s32 %s133, 1
      %s135 = scalar_select %p132, %s133, %s134
      %p138 = pneg %p132
      %p139 = scmp.eq.s32.totalorder %s18, 1
      %p140 = por %p138, %p139
      %p141 = scmp.ne.s32.totalorder %s133, %s136
      %p142 = scmp.eq.s32.totalorder %s18, 0
      %p143 = por %p141, %p142
      %p144 = scmp.ne.s32.totalorder %s133, %s136
      %p145 = scmp.eq.s32.totalorder %s23, 1
      %p146 = por %p144, %p145
      %p147 = scmp.ne.s32.totalorder %s136, %s137
      %p148 = scmp.eq.s32.totalorder %s23, 0
      %p149 = por %p147, %p148
      %p150 = scmp.ne.s32.totalorder %s136, %s137
      %p151 = scmp.eq.s32.totalorder %s24, 1
      %p152 = por %p150, %p151
      %p154 = scmp.ne.s32.totalorder %s137, %s153
      %p155 = scmp.eq.s32.totalorder %s24, 0
      %p156 = por %p154, %p155
      %p157 = scmp.le.s32.totalorder 1, %s18
      %p158 = scmp.lt.s32.totalorder %s18, 3
      %p159 = pnand %p157, %p158
      %p160 = pneg %p159
      // Predicated region
      $region9: #{tpu_custom_call.1} parent=5 // pred_check
        _
      $region10: #{tpu_custom_call.1} parent=5 // pred_check_branch
        %162 = sbr.rel (%p159) target = $region12
      $region11: #{tpu_custom_call.1} parent=5 // pred_region
        %s163 = ssub.s32 %s18, 1
        // Predicated region
        $region13: #{tpu_custom_call.1} parent=11 // pred_check
          %p164 = pneg %p79
        $region14: #{tpu_custom_call.1} parent=11 // pred_check_branch
          %166 = sbr.rel (%p164) target = $region16
        $region15: #{tpu_custom_call.1} parent=11 // pred_region
          %168 = vsyncadd [#allocation7], 0
          %s169 = sshll.u32 %s1, 4
          %s170 = int_to_ptr.hbm [resolvable:$true] %s169
          %s171 = sshll.u32 [#allocation6], 4
          %s172 = int_to_ptr.vmem [resolvable:$true] %s171
          %177 = dma.hbm_to_vmem [thread:$0]  %s170, 512, %s172, [#allocation7], 128, 128, 8
        $region16: #{tpu_custom_call.1} parent=11 // pred_fallthru
          _
        // Predicated region
        $region17: #{tpu_custom_call.1} parent=11 // pred_check
          %p178 = pneg %p100
        $region18: #{tpu_custom_call.1} parent=11 // pred_check_branch
          %180 = sbr.rel (%p178) target = $region20
        $region19: #{tpu_custom_call.1} parent=11 // pred_region
          _
        $region20: #{tpu_custom_call.1} parent=11 // pred_fallthru
          _
        // Predicated region
        $region21: #{tpu_custom_call.1} parent=11 // pred_check
          %p181 = pneg %p121
        $region22: #{tpu_custom_call.1} parent=11 // pred_check_branch
          %183 = sbr.rel (%p181) target = $region24
        $region23: #{tpu_custom_call.1} parent=11 // pred_region
          _
        $region24: #{tpu_custom_call.1} parent=11 // pred_fallthru
          _
      $region12: #{tpu_custom_call.1} parent=5 // pred_fallthru
        _
      %p184 = scmp.lt.s32.totalorder %s18, 2
      // Predicated region
      $region25: #{tpu_custom_call.1} parent=5 // pred_check
        %p185 = pneg %p184
      $region26: #{tpu_custom_call.1} parent=5 // pred_check_branch
        %187 = sbr.rel (%p185) target = $region28
      $region27: #{tpu_custom_call.1} parent=5 // pred_region
        // Predicated region
        $region29: #{tpu_custom_call.1} parent=27 // pred_check
          %p188 = pneg %p52
        $region30: #{tpu_custom_call.1} parent=27 // pred_check_branch
          %190 = sbr.rel (%p188) target = $region32
        $region31: #{tpu_custom_call.1} parent=27 // pred_region
          %s191 = sand.u32 %s42, 1
          %s192 = scalar_lea.sflag [#allocation4], %s191
          %s193 = sand.u32 %s42, 1
          %s194 = smul.addr %s193, 8
          %s195 = scalar_lea.vmem [#allocation3], %s194
          %197 = vsyncadd %s192, 0
          %s198 = sadd.s32 %s26, %s25
          %s199 = smul.addr %s198, 8
          %s200 = scalar_lea.hbm %s0, %s199
          %s202 = sshll.u32 %s200, 4
          %s203 = int_to_ptr.hbm [resolvable:$true] %s202
          %s204 = sshll.u32 %s195, 4
          %s205 = int_to_ptr.vmem [resolvable:$true] %s204
          %207 = dma.hbm_to_vmem [thread:$0]  %s203, 128, %s205, %s192
        $region32: #{tpu_custom_call.1} parent=27 // pred_fallthru
          _
      $region28: #{tpu_custom_call.1} parent=5 // pred_fallthru
        _
      %p208 = scmp.le.s32.totalorder 1, %s18
      %p209 = scmp.lt.s32.totalorder %s18, 3
      %p210 = pnand %p208, %p209
      %p211 = pneg %p210
      // Predicated region
      $region33: #{tpu_custom_call.1} parent=5 // pred_check
        _
      $region34: #{tpu_custom_call.1} parent=5 // pred_check_branch
        %213 = sbr.rel (%p210) target = $region36
      $region35: #{tpu_custom_call.1} parent=5 // pred_region
        %s214 = ssub.s32 %s18, 1
        %s215 = sand.u32 %s45, 1
        %s216 = scalar_lea.sflag [#allocation4], %s215
        %s217 = sand.u32 %s45, 1
        %s218 = smul.addr %s217, 8
        %s219 = scalar_lea.vmem [#allocation3], %s218
        // Predicated region
        $region37: #{tpu_custom_call.1} parent=35 // pred_check
          %p220 = pneg %p58
        $region38: #{tpu_custom_call.1} parent=35 // pred_check_branch
          %222 = sbr.rel (%p220) target = $region40
        $region39: #{tpu_custom_call.1} parent=35 // pred_region
          %224 = dma.done %s216, 128
        $region40: #{tpu_custom_call.1} parent=35 // pred_fallthru
          _
        // Predicated region
        $region41: #{tpu_custom_call.1} parent=35 // pred_check
          %p225 = pneg %p79
        $region42: #{tpu_custom_call.1} parent=35 // pred_check_branch
          %227 = sbr.rel (%p225) target = $region44
        $region43: #{tpu_custom_call.1} parent=35 // pred_region
          %229 = dma.done [#allocation7], 512
        $region44: #{tpu_custom_call.1} parent=35 // pred_fallthru
          _
        %s230 = sand.u32 %s45, 1
        %s231 = scalar_lea.sflag [#allocation4], %s230
        %s232 = sand.u32 %s45, 1
        %s233 = smul.addr %s232, 8
        %s234 = scalar_lea.vmem [#allocation3], %s233
        %p235 = pneg %p58
        %p236 = pneg %p55
        %p237 = pneg %p79
        %p238 = pneg %p76
        %p239 = pneg %p100
        %p240 = pneg %p97
        %p241 = pneg %p121
        %p242 = pneg %p118
        %p243 = pneg %p149
        %p244 = pneg %p146
        %s245 = sand.u32 %s136, 1
        %s246 = scalar_lea.sflag [#allocation5], %s245
        %s247 = sand.u32 %s136, 1
        %s248 = smul.addr %s247, 8
        %s249 = scalar_lea.vmem [#allocation8], %s248
        %v250 = vld [vmem:[%s219] sm:$0xff]
        %v251 = vld [vmem:[#allocation6] sm:$0xff]
        %v252 = vld [vmem:[#allocation6 + $0x8] sm:$0xff]
        %v253 = vld [vmem:[#allocation6 + $0x10] sm:$0xff]
        %v254 = vld [vmem:[#allocation6 + $0x18] sm:$0xff]
        %v255 = vld [vmem:[%s2] sm:$0x1]
        %v257 = vperm.slane %v255, 0
        %vm259 = vcmask 261120
        %v261 = vsel %vm259, %v250, 0
        %263 = vmatpush.msra.mxu0 0.0
        %264 = vmatpush.msra.mxu0 0.0
        %265 = vmatpush.msra.mxu0 0.0
        %266 = vmatpush.msra.mxu0 0.0
        %267 = vmatpush.msra.mxu0 0.0
        %268 = vmatpush.msra.mxu0 0.0
        %269 = vmatpush.msra.mxu0 0.0
        %270 = vmatpush.msra.mxu0 0.0
        %271 = vmatpush.msra.mxu0 0.0
        %272 = vmatpush.msra.mxu0 0.0
        %273 = vmatpush.msra.mxu0 0.0
        %274 = vmatpush.msra.mxu0 0.0
        %275 = vmatpush.msra.mxu0 %v254
        %276 = vmatpush.msra.mxu0 %v253
        %277 = vmatpush.msra.mxu0 %v252
        %278 = vmatpush.msra.mxu0 %v251
        %279 = vmatmul.f32.gmra.mxu0 %v261
        %v280 = vpop.f32.mrf.mxu0
        %v281 = vadd.f32 %v257, %v280
        %282 = vdwg.mxu0
        %v283 = vsub.f32 1.0, %v281
        %s284 = sld [smem:[#allocation2]]
        %vm285 = vcmp.gt.f32.partialorder %v283, 0.1
        %v286 = vsel %vm285, 1, 0
        %v287 = vcvt.s32.f32 %v286
        %v288 = vstv %s284
        %v289 = vmul.f32 %v283, %v288
        %v290 = vmul.f32 %v289, 1.442695
        %v291 = vpow.pop %v290
        %v292 = vmul.f32 %v291, %v287
        %293 = vadd.xlane.f32.xlu0 %v292
        %v294 = vpop.xlane.xlu0 %293
        %v295 = vadd.f32 %v294, 1e-05
        %v296 = vrcp.pop %v295
        %v297 = vmul.f32 %v295, %v296
        %v298 = vsub.f32 1.0, %v297
        %v299 = vmul.f32 %v296, %v298
        %v300 = vadd.f32 %v296, %v299
        %vm301 = vweird.f32 %v295
        %vm302 = vweird.f32 %v296
        %vm303 = vmor %vm301, %vm302
        %v304 = vsel %vm303, %v296, %v300
        %v305 = vand.u32 2147483647, %v295
        %vm306 = vcmp.eq.f32.partialorder %v305, 8.507059e+37
        %v307 = vand.u32 %v295, 2147483648
        %v308 = vor.u32 1.1754944e-38, %v307
        %v309 = vsel %vm306, %v308, %v304
        %v310 = vmul.f32 %v292, %v309
        %311 = vst [vmem:[%s249] sm:$0xff] %v310
        %s312 = sand.u32 %s136, 1
        %s313 = scalar_lea.sflag [#allocation5], %s312
        %s314 = sand.u32 %s136, 1
        %s315 = smul.addr %s314, 8
        %s316 = scalar_lea.vmem [#allocation8], %s315
        // Predicated region
        $region45: #{tpu_custom_call.1} parent=35 // pred_check
          %p317 = pneg %p146
        $region46: #{tpu_custom_call.1} parent=35 // pred_check_branch
          %319 = sbr.rel (%p317) target = $region48
        $region47: #{tpu_custom_call.1} parent=35 // pred_region
          %321 = vsyncadd %s313, 0
          %s322 = sadd.s32 %s28, %s27
          %s323 = smul.addr %s322, 8
          %s324 = scalar_lea.hbm %s4, %s323
          %s326 = sshll.u32 %s316, 4
          %s327 = int_to_ptr.vmem [resolvable:$true] %s326
          %s328 = sshll.u32 %s324, 4
          %s329 = int_to_ptr.hbm [resolvable:$true] %s328
          %331 = dma.vmem_to_hbm [thread:$0]  %s327, 128, %s329, %s313
        $region48: #{tpu_custom_call.1} parent=35 // pred_fallthru
          _
      $region36: #{tpu_custom_call.1} parent=5 // pred_fallthru
        _
      %p332 = scmp.le.s32.totalorder 2, %s18
      // Predicated region
      $region49: #{tpu_custom_call.1} parent=5 // pred_check
        %p333 = pneg %p332
      $region50: #{tpu_custom_call.1} parent=5 // pred_check_branch
        %335 = sbr.rel (%p333) target = $region52
      $region51: #{tpu_custom_call.1} parent=5 // pred_region
        %s336 = ssub.s32 %s18, 2
        // Predicated region
        $region53: #{tpu_custom_call.1} parent=51 // pred_check
          %p337 = pneg %p152
        $region54: #{tpu_custom_call.1} parent=51 // pred_check_branch
          %339 = sbr.rel (%p337) target = $region56
        $region55: #{tpu_custom_call.1} parent=51 // pred_region
          %s340 = sand.u32 %s137, 1
          %s341 = scalar_lea.sflag [#allocation5], %s340
          %s342 = sand.u32 %s137, 1
          %s343 = smul.addr %s342, 8
          %s344 = scalar_lea.vmem [#allocation8], %s343
          %346 = dma.done %s341, 128
        $region56: #{tpu_custom_call.1} parent=51 // pred_fallthru
          _
      $region52: #{tpu_custom_call.1} parent=5 // pred_fallthru
        _
    $region6: #{tpu_custom_call.1} parent=1 // loop_footer
      %s22 = sadd.s32 1, %s18
    $region7: #{tpu_custom_call.1} parent=1 // loop_footer_branch
      %17 = sbr.rel target = $region3
    $region8: #{tpu_custom_call.1} parent=1 // loop_exit
      _
    %347 = vsyncpa [#allocation4], 1
    %s348 = scalar_lea.sflag [#allocation4], 1
    %349 = vsyncpa %s348, 1
    %350 = vsyncpa [#allocation7], 1
    %351 = vsyncpa [#allocation5], 1
    %s352 = scalar_lea.sflag [#allocation5], 1
    %353 = vsyncpa %s352, 1

</llo_original>
